<compile_context>
chip_gen: v7x
topology: tpu7x:2x2x1
jax: 0.10.0
libtpu: 0.0.40
codegen_flags: <defaults>
</compile_context>

<pallas_src>
import jax
import jax.numpy as jnp
import numpy as np
from jax.experimental import pallas as pl


# ----------------------------- Pallas kernels -----------------------------

def _conv_relu_pool_kernel(p_ref, w_ref, b_ref, o_ref):
    """Fused Conv2d(VALID) + bias + ReLU + MaxPool2d(2,2) for one stage.

    p_ref: (4, CK, L)  im2col patches, pool-phase major (bf16)
    w_ref: (Cout, CK)  flattened conv weights (bf16)
    b_ref: (Cout, 1)   bias (f32)
    o_ref: (Cout, L)   pooled activations (f32), L = N*PH*PW
    """
    w = w_ref[...]
    m = jnp.dot(w, p_ref[0], preferred_element_type=jnp.float32)
    for phase in range(1, 4):
        m = jnp.maximum(
            m, jnp.dot(w, p_ref[phase], preferred_element_type=jnp.float32))
    # max over the 4 pool phases == 2x2 maxpool of the conv output.
    o_ref[...] = jnp.maximum(m + b_ref[...], 0.0)


def _conv_relu_pool_add_kernel(p_ref, w_ref, b_ref, o_ref):
    """Stage 2: c2_1 and c2_2 as ONE stacked matmul + fused residual add.

    w_ref rows [0:16] are c2_1, rows [16:32] are c2_2; the module's
    `out = c2_2(h); out += c2_1(h)` becomes an elementwise add of the two
    row blocks after the shared conv+bias+ReLU+pool epilogue.
    """
    w = w_ref[...]
    m = jnp.dot(w, p_ref[0], preferred_element_type=jnp.float32)
    for phase in range(1, 4):
        m = jnp.maximum(
            m, jnp.dot(w, p_ref[phase], preferred_element_type=jnp.float32))
    y = jnp.maximum(m + b_ref[...], 0.0)          # (32, L), f32 epilogue
    o_ref[...] = y[0:16, :] + y[16:32, :]          # residual add, fused


# ----------------------------- JAX wrappers -------------------------------

def _phase_pool_patches(x, k):
    """im2col patches for Conv(k, VALID) followed by MaxPool2d(2, 2).

    x: (N, C, H, W) -> (4, C*k*k, N*PH*PW), PH = (H-k+1)//2.
    Leading axis enumerates the (dh, dw) offset inside each 2x2 pool window so
    in-kernel pooling is an elementwise max over that axis.  Pure layout glue
    (strided slices / transpose / reshape) done once in XLA.
    """
    n, c, h, w = x.shape
    oh, ow = h - k + 1, w - k + 1
    ph, pw = oh // 2, ow // 2
    phases = []
    for dh in range(2):
        for dw in range(2):
            taps = []
            for kh in range(k):
                for kw in range(k):
                    r0, c0 = dh + kh, dw + kw
                    taps.append(x[:, :, r0:r0 + 2 * ph - 1:2,
                                  c0:c0 + 2 * pw - 1:2])       # (N, C, PH, PW)
            t = jnp.stack(taps, axis=2)                         # (N, C, k*k, PH, PW)
            t = jnp.transpose(t, (1, 2, 0, 3, 4))               # (C, k*k, N, PH, PW)
            phases.append(t.reshape(c * k * k, n * ph * pw))
    return jnp.stack(phases, axis=0)                            # (4, C*k*k, N*PH*PW)


def lenet_frame_frontend(img, params):
    n = img.shape[0]

    # ---------------- stage 1: c1 (conv+ReLU+pool) ----------------
    p1 = _phase_pool_patches(img, 5).astype(jnp.bfloat16)       # (4, 25, n*196)
    w1 = params["w1"].reshape(6, 25).astype(jnp.bfloat16)
    b1 = params["b1"].reshape(6, 1).astype(jnp.float32)
    l1 = n * 14 * 14
    h2d = pl.pallas_call(
        _conv_relu_pool_kernel,
        out_shape=jax.ShapeDtypeStruct((6, l1), jnp.float32),
        cost_estimate=pl.CostEstimate(
            flops=2 * 4 * 6 * 25 * l1, transcendentals=0,
            bytes_accessed=p1.size * 2 + w1.size * 2 + b1.size * 4 + 6 * l1 * 4),
    )(p1, w1, b1)

    # layout glue back to NCHW for the second im2col (tiny: 6 x n*196 floats)
    h = jnp.transpose(h2d.reshape(6, n, 14, 14), (1, 0, 2, 3))  # (n, 6, 14, 14)

    # -------- stage 2: c2_1 + c2_2 share h, one matmul + residual add --------
    p2 = _phase_pool_patches(h, 5).astype(jnp.bfloat16)         # (4, 150, n*25)
    wc = jnp.concatenate([params["w21"].reshape(16, 150),
                          params["w22"].reshape(16, 150)],
                         axis=0).astype(jnp.bfloat16)           # (32, 150)
    bc = jnp.concatenate([params["b21"], params["b22"]]
                         ).reshape(32, 1).astype(jnp.float32)
    l2 = n * 5 * 5
    out2d = pl.pallas_call(
        _conv_relu_pool_add_kernel,
        out_shape=jax.ShapeDtypeStruct((16, l2), jnp.float32),
        cost_estimate=pl.CostEstimate(
            flops=2 * 4 * 32 * 150 * l2, transcendentals=0,
            bytes_accessed=p2.size * 2 + wc.size * 2 + bc.size * 4 + 16 * l2 * 4),
    )(p2, wc, bc)

    # final layout glue to NCHW
    return jnp.transpose(out2d.reshape(16, n, 5, 5), (1, 0, 2, 3))


# ----------------------------- pure-JAX reference --------------------------

def _ref_stage(x, w, b):
    y = jax.lax.conv_general_dilated(
        x, w, window_strides=(1, 1), padding="VALID",
        dimension_numbers=("NCHW", "OIHW", "NCHW"),
        precision=jax.lax.Precision.HIGHEST)
    y = jnp.maximum(y + b[None, :, None, None], 0.0)
    return jax.lax.reduce_window(y, -jnp.inf, jax.lax.max,
                                 (1, 1, 2, 2), (1, 1, 2, 2), "VALID")


def _ref_forward(img, params):
    h = _ref_stage(img, params["w1"], params["b1"])
    x = _ref_stage(h, params["w21"], params["b21"])
    out = _ref_stage(h, params["w22"], params["b22"])
    return out + x


# ----------------------------- main ----------------------------------------

if __name__ == "__main__":
    key = jax.random.PRNGKey(0)
    k1, k2, k3, k4, k5, k6, kx = jax.random.split(key, 7)

    # Deterministic synthetic parameters (shapes from LeNet-5 c1/c2_1/c2_2).
    params = {
        "w1":  jax.random.normal(k1, (6, 1, 5, 5), jnp.float32) * 0.2,
        "b1":  jax.random.normal(k2, (6,), jnp.float32) * 0.1,
        "w21": jax.random.normal(k3, (16, 6, 5, 5), jnp.float32) * 0.08,
        "b21": jax.random.normal(k4, (16,), jnp.float32) * 0.1,
        "w22": jax.random.normal(k5, (16, 6, 5, 5), jnp.float32) * 0.08,
        "b22": jax.random.normal(k6, (16,), jnp.float32) * 0.1,
    }

    # LeNet-5 frame input: NCHW, 1 channel, 32x32, small batch.
    img = jax.random.normal(kx, (2, 1, 32, 32), jnp.float32)

    fwd = jax.jit(lenet_frame_frontend)
    out = jax.block_until_ready(fwd(img, params))
    ref = jax.block_until_ready(_ref_forward(img, params))

    assert out.shape == (2, 16, 5, 5), out.shape
    # bf16 MXU inputs with f32 accumulation vs. HIGHEST-precision f32 reference.
    np.testing.assert_allclose(np.asarray(out), np.asarray(ref),
                               rtol=2e-2, atol=2e-2)

    print("KERNEL_OK")
</pallas_src>

<mosaic_0001>
module attributes {stable_mosaic.version = 11 : i64} {
  func.func @_conv_relu_pool_kernel(%arg0: memref<4x25x392xbf16, #tpu.memory_space<vmem>>, %arg1: memref<6x25xbf16, #tpu.memory_space<vmem>>, %arg2: memref<6x1xf32, #tpu.memory_space<vmem>>, %arg3: memref<6x392xf32, #tpu.memory_space<vmem>>) attributes {dimension_semantics = [], scalar_prefetch = 0 : i64, scratch_operands = 0 : i64, tpu.core_type = #tpu.core_type<tc>} {
    %c0 = arith.constant 0 : index
    %c0_0 = arith.constant 0 : index
    %0 = vector.load %arg1[%c0, %c0_0] : memref<6x25xbf16, #tpu.memory_space<vmem>>, vector<6x25xbf16>
    %c0_1 = arith.constant 0 : index
    %c0_2 = arith.constant 0 : index
    %c0_3 = arith.constant 0 : index
    %1 = vector.load %arg0[%c0_1, %c0_2, %c0_3] : memref<4x25x392xbf16, #tpu.memory_space<vmem>>, vector<1x25x392xbf16>
    %2 = vector.shape_cast %1 : vector<1x25x392xbf16> to vector<25x392xbf16>
    %cst = arith.constant dense<0.000000e+00> : vector<6x392xf32>
    %3 = tpu.matmul %0, %2, %cst {dimension_numbers = #tpu.dot_dimension_numbers<[1], [0], [0], [1], [0, 0, 1, 1], [], []>} : vector<6x25xbf16>, vector<25x392xbf16>, vector<6x392xf32> -> vector<6x392xf32>
    %c1 = arith.constant 1 : index
    %c0_4 = arith.constant 0 : index
    %c0_5 = arith.constant 0 : index
    %4 = vector.load %arg0[%c1, %c0_4, %c0_5] : memref<4x25x392xbf16, #tpu.memory_space<vmem>>, vector<1x25x392xbf16>
    %5 = vector.shape_cast %4 : vector<1x25x392xbf16> to vector<25x392xbf16>
    %cst_6 = arith.constant dense<0.000000e+00> : vector<6x392xf32>
    %6 = tpu.matmul %0, %5, %cst_6 {dimension_numbers = #tpu.dot_dimension_numbers<[1], [0], [0], [1], [0, 0, 1, 1], [], []>} : vector<6x25xbf16>, vector<25x392xbf16>, vector<6x392xf32> -> vector<6x392xf32>
    %7 = arith.maximumf %3, %6 : vector<6x392xf32>
    %c2 = arith.constant 2 : index
    %c0_7 = arith.constant 0 : index
    %c0_8 = arith.constant 0 : index
    %8 = vector.load %arg0[%c2, %c0_7, %c0_8] : memref<4x25x392xbf16, #tpu.memory_space<vmem>>, vector<1x25x392xbf16>
    %9 = vector.shape_cast %8 : vector<1x25x392xbf16> to vector<25x392xbf16>
    %cst_9 = arith.constant dense<0.000000e+00> : vector<6x392xf32>
    %10 = tpu.matmul %0, %9, %cst_9 {dimension_numbers = #tpu.dot_dimension_numbers<[1], [0], [0], [1], [0, 0, 1, 1], [], []>} : vector<6x25xbf16>, vector<25x392xbf16>, vector<6x392xf32> -> vector<6x392xf32>
    %11 = arith.maximumf %7, %10 : vector<6x392xf32>
    %c3 = arith.constant 3 : index
    %c0_10 = arith.constant 0 : index
    %c0_11 = arith.constant 0 : index
    %12 = vector.load %arg0[%c3, %c0_10, %c0_11] : memref<4x25x392xbf16, #tpu.memory_space<vmem>>, vector<1x25x392xbf16>
    %13 = vector.shape_cast %12 : vector<1x25x392xbf16> to vector<25x392xbf16>
    %cst_12 = arith.constant dense<0.000000e+00> : vector<6x392xf32>
    %14 = tpu.matmul %0, %13, %cst_12 {dimension_numbers = #tpu.dot_dimension_numbers<[1], [0], [0], [1], [0, 0, 1, 1], [], []>} : vector<6x25xbf16>, vector<25x392xbf16>, vector<6x392xf32> -> vector<6x392xf32>
    %15 = arith.maximumf %11, %14 : vector<6x392xf32>
    %c0_13 = arith.constant 0 : index
    %c0_14 = arith.constant 0 : index
    %16 = vector.load %arg2[%c0_13, %c0_14] : memref<6x1xf32, #tpu.memory_space<vmem>>, vector<6x1xf32>
    %17 = vector.broadcast %16 : vector<6x1xf32> to vector<6x392xf32>
    %18 = arith.addf %15, %17 : vector<6x392xf32>
    %cst_15 = arith.constant 0.000000e+00 : f32
    %19 = vector.broadcast %cst_15 : f32 to vector<6x392xf32>
    %20 = arith.maximumf %18, %19 : vector<6x392xf32>
    %c0_16 = arith.constant 0 : index
    %c0_17 = arith.constant 0 : index
    %21 = vector.load %arg3[%c0_16, %c0_17] : memref<6x392xf32, #tpu.memory_space<vmem>>, vector<6x392xf32>
    tpu.vector_store %arg3[%c0_16, %c0_17], %20 {strides = array<i32>} : memref<6x392xf32, #tpu.memory_space<vmem>>, vector<6x392xf32>,
    return
  }
}

module attributes {stable_mosaic.version = 11 : i64} {
  func.func @_conv_relu_pool_add_kernel(%arg0: memref<4x150x50xbf16, #tpu.memory_space<vmem>>, %arg1: memref<32x150xbf16, #tpu.memory_space<vmem>>, %arg2: memref<32x1xf32, #tpu.memory_space<vmem>>, %arg3: memref<16x50xf32, #tpu.memory_space<vmem>>) attributes {dimension_semantics = [], scalar_prefetch = 0 : i64, scratch_operands = 0 : i64, tpu.core_type = #tpu.core_type<tc>} {
    %c0 = arith.constant 0 : index
    %c0_0 = arith.constant 0 : index
    %0 = vector.load %arg1[%c0, %c0_0] : memref<32x150xbf16, #tpu.memory_space<vmem>>, vector<32x150xbf16>
    %c0_1 = arith.constant 0 : index
    %c0_2 = arith.constant 0 : index
    %c0_3 = arith.constant 0 : index
    %1 = vector.load %arg0[%c0_1, %c0_2, %c0_3] : memref<4x150x50xbf16, #tpu.memory_space<vmem>>, vector<1x150x50xbf16>
    %2 = vector.shape_cast %1 : vector<1x150x50xbf16> to vector<150x50xbf16>
    %cst = arith.constant dense<0.000000e+00> : vector<32x50xf32>
    %3 = tpu.matmul %0, %2, %cst {dimension_numbers = #tpu.dot_dimension_numbers<[1], [0], [0], [1], [0, 0, 1, 1], [], []>} : vector<32x150xbf16>, vector<150x50xbf16>, vector<32x50xf32> -> vector<32x50xf32>
    %c1 = arith.constant 1 : index
    %c0_4 = arith.constant 0 : index
    %c0_5 = arith.constant 0 : index
    %4 = vector.load %arg0[%c1, %c0_4, %c0_5] : memref<4x150x50xbf16, #tpu.memory_space<vmem>>, vector<1x150x50xbf16>
    %5 = vector.shape_cast %4 : vector<1x150x50xbf16> to vector<150x50xbf16>
    %cst_6 = arith.constant dense<0.000000e+00> : vector<32x50xf32>
    %6 = tpu.matmul %0, %5, %cst_6 {dimension_numbers = #tpu.dot_dimension_numbers<[1], [0], [0], [1], [0, 0, 1, 1], [], []>} : vector<32x150xbf16>, vector<150x50xbf16>, vector<32x50xf32> -> vector<32x50xf32>
    %7 = arith.maximumf %3, %6 : vector<32x50xf32>
    %c2 = arith.constant 2 : index
    %c0_7 = arith.constant 0 : index
    %c0_8 = arith.constant 0 : index
    %8 = vector.load %arg0[%c2, %c0_7, %c0_8] : memref<4x150x50xbf16, #tpu.memory_space<vmem>>, vector<1x150x50xbf16>
    %9 = vector.shape_cast %8 : vector<1x150x50xbf16> to vector<150x50xbf16>
    %cst_9 = arith.constant dense<0.000000e+00> : vector<32x50xf32>
    %10 = tpu.matmul %0, %9, %cst_9 {dimension_numbers = #tpu.dot_dimension_numbers<[1], [0], [0], [1], [0, 0, 1, 1], [], []>} : vector<32x150xbf16>, vector<150x50xbf16>, vector<32x50xf32> -> vector<32x50xf32>
    %11 = arith.maximumf %7, %10 : vector<32x50xf32>
    %c3 = arith.constant 3 : index
    %c0_10 = arith.constant 0 : index
    %c0_11 = arith.constant 0 : index
    %12 = vector.load %arg0[%c3, %c0_10, %c0_11] : memref<4x150x50xbf16, #tpu.memory_space<vmem>>, vector<1x150x50xbf16>
    %13 = vector.shape_cast %12 : vector<1x150x50xbf16> to vector<150x50xbf16>
    %cst_12 = arith.constant dense<0.000000e+00> : vector<32x50xf32>
    %14 = tpu.matmul %0, %13, %cst_12 {dimension_numbers = #tpu.dot_dimension_numbers<[1], [0], [0], [1], [0, 0, 1, 1], [], []>} : vector<32x150xbf16>, vector<150x50xbf16>, vector<32x50xf32> -> vector<32x50xf32>
    %15 = arith.maximumf %11, %14 : vector<32x50xf32>
    %c0_13 = arith.constant 0 : index
    %c0_14 = arith.constant 0 : index
    %16 = vector.load %arg2[%c0_13, %c0_14] : memref<32x1xf32, #tpu.memory_space<vmem>>, vector<32x1xf32>
    %17 = vector.broadcast %16 : vector<32x1xf32> to vector<32x50xf32>
    %18 = arith.addf %15, %17 : vector<32x50xf32>
    %cst_15 = arith.constant 0.000000e+00 : f32
    %19 = vector.broadcast %cst_15 : f32 to vector<32x50xf32>
    %20 = arith.maximumf %18, %19 : vector<32x50xf32>
    %21 = vector.extract_strided_slice %20 {offsets = [0, 0], sizes = [16, 50], strides = [1, 1]} : vector<32x50xf32> to vector<16x50xf32>
    %22 = vector.extract_strided_slice %20 {offsets = [16, 0], sizes = [16, 50], strides = [1, 1]} : vector<32x50xf32> to vector<16x50xf32>
    %23 = arith.addf %21, %22 : vector<16x50xf32>
    %c0_16 = arith.constant 0 : index
    %c0_17 = arith.constant 0 : index
    %24 = vector.load %arg3[%c0_16, %c0_17] : memref<16x50xf32, #tpu.memory_space<vmem>>, vector<16x50xf32>
    tpu.vector_store %arg3[%c0_16, %c0_17], %23 {strides = array<i32>} : memref<16x50xf32, #tpu.memory_space<vmem>>, vector<16x50xf32>,
    return
  }
}

</mosaic_0001>

<llo_original>
// kernel: lenet_frame_frontend.2
$region0: #{lenet_frame_frontend.2}
  #allocation0 [shape = 'u32[]', space=smem, size = 0x4, offset = 0x4, fixed_abs, tag = 'smem constant byte address 0x4 - core index']
  #allocation1 [shape = 'u32[144,128]{1,0:T(1,128)}', space=vmem, size = 0x12000, scoped, tag = 'internal scratch']
  %s0 = inlined_call_operand.vmem [shape: bf16[4,25,392], index: 0, kind: input, shape index: {}]
  %s1 = inlined_call_operand.vmem [shape: bf16[6,25], index: 1, kind: input, shape index: {}]
  %s2 = inlined_call_operand.vmem [shape: f32[6,1], index: 2, kind: input, shape index: {}]
  %s3 = inlined_call_operand.vmem [shape: f32[6,392], index: 3, kind: output, shape index: {}]
  %s4 = sld [smem:[#allocation0]]
  $region22: #{lenet_frame_frontend.2} parent=0
    _
  %s6 = ssub.s32 1, %s4
  %s7 = scalar_select 0, %s6, %s4
  // Predicated region
  $region2: #{lenet_frame_frontend.2} parent=0 // pred_check
    _
  $region3: #{lenet_frame_frontend.2} parent=0 // pred_check_branch
    %9 = sbr.rel (0) target = $region5
  $region4: #{lenet_frame_frontend.2} parent=0 // pred_region
    _
  $region5: #{lenet_frame_frontend.2} parent=0 // pred_fallthru
    _
  // Predicated region
  $region6: #{lenet_frame_frontend.2} parent=0 // pred_check
    _
  $region7: #{lenet_frame_frontend.2} parent=0 // pred_check_branch
    %11 = sbr.rel (0) target = $region9
  $region8: #{lenet_frame_frontend.2} parent=0 // pred_region
    _
  $region9: #{lenet_frame_frontend.2} parent=0 // pred_fallthru
    _
  // Predicated region
  $region10: #{lenet_frame_frontend.2} parent=0 // pred_check
    _
  $region11: #{lenet_frame_frontend.2} parent=0 // pred_check_branch
    %13 = sbr.rel (0) target = $region13
  $region12: #{lenet_frame_frontend.2} parent=0 // pred_region
    _
  $region13: #{lenet_frame_frontend.2} parent=0 // pred_fallthru
    _
  %v15 = vld [vmem:[%s1] sm:$0x7]
  %v16 = vld [vmem:[%s0] sm:$0xff]
  %v17 = vld [vmem:[%s0 + $0x8] sm:$0xff]
  %v18 = vld [vmem:[%s0 + $0x10] sm:$0xff]
  %v19 = vld [vmem:[%s0 + $0x18] sm:$0xff]
  %v20 = vld [vmem:[%s0 + $0x20] sm:$0xff]
  %v21 = vld [vmem:[%s0 + $0x28] sm:$0xff]
  %v22 = vld [vmem:[%s0 + $0x30] sm:$0x11]
  %v23 = vld [vmem:[%s0 + $0x38] sm:$0x11]
  %v32 = vunpack.c.l.b16 %v16
  %v33 = vunpack.c.h.b16 %v16
  %v34 = vunpack.c.l.b16 %v17
  %v35 = vunpack.c.h.b16 %v17
  %v36 = vunpack.c.l.b16 %v18
  %v37 = vunpack.c.h.b16 %v18
  %v38 = vunpack.c.l.b16 %v19
  %v39 = vunpack.c.h.b16 %v19
  %v40 = vunpack.c.l.b16 %v20
  %v41 = vunpack.c.h.b16 %v20
  %v42 = vunpack.c.l.b16 %v21
  %v43 = vunpack.c.h.b16 %v21
  %v44 = vunpack.c.l.b16 %v22
  %v45 = vunpack.c.h.b16 %v22
  %v46 = vunpack.c.l.b16 %v23
  %v47 = vunpack.c.h.b16 %v23
  %v48 = vpack.c.b16 %v36, %v32
  %v49 = vpack.c.b16 %v37, %v33
  %v50 = vpack.c.b16 %v38, %v34
  %v51 = vpack.c.b16 %v39, %v35
  %v52 = vpack.c.b16 %v44, %v40
  %v53 = vpack.c.b16 %v45, %v41
  %v54 = vpack.c.b16 %v46, %v42
  %v55 = vpack.c.b16 %v47, %v43
  %vm60 = vcmask 203776
  %v62 = vsel %vm60, %v15, 0
  %vm64 = vcmask 1043456
  %vm65 = vcmask 1044480
  %v66 = vsel %vm64, 4294967295, 65535
  %v67 = vsel %vm65, %v66, 0
  %v69 = vand.u32 %v52, %v67
  %v72 = vand.u32 %v53, %v67
  %v75 = vand.u32 %v54, %v67
  %v78 = vand.u32 %v55, %v67
  %80 = vmatprep.subr.bf16.mxu0 %v49
  %81 = vmatpush1.bf16.msra.mxu0 %v48
  %82 = vmatprep.subr.bf16.mxu0 %v72
  %83 = vmatpush1.bf16.msra.mxu0 %v69
  %84 = vmatprep.subr.bf16.mxu0 0
  %85 = vmatpush1.bf16.msra.mxu0 0
  %86 = vmatprep.subr.bf16.mxu0 0
  %87 = vmatpush1.bf16.msra.mxu0 0
  %88 = vmatprep.subr.bf16.mxu0 0
  %89 = vmatpush1.bf16.msra.mxu0 0
  %90 = vmatprep.subr.bf16.mxu0 0
  %91 = vmatpush1.bf16.msra.mxu0 0
  %92 = vmatprep.subr.bf16.mxu0 0
  %93 = vmatpush1.bf16.msra.mxu0 0
  %94 = vmatprep.subr.bf16.mxu0 0
  %95 = vmatpush1.bf16.msra.mxu0 0
  %96 = vmatprep.subr.bf16.mxu0 0
  %97 = vmatpush1.bf16.msra.mxu0 0
  %98 = vmatprep.subr.bf16.mxu0 0
  %99 = vmatpush1.bf16.msra.mxu0 0
  %100 = vmatprep.subr.bf16.mxu0 0
  %101 = vmatpush1.bf16.msra.mxu0 0
  %102 = vmatprep.subr.bf16.mxu0 0
  %103 = vmatpush1.bf16.msra.mxu0 0
  %104 = vmatprep.subr.bf16.mxu0 0
  %105 = vmatpush1.bf16.msra.mxu0 0
  %106 = vmatprep.subr.bf16.mxu0 0
  %107 = vmatpush1.bf16.msra.mxu0 0
  %108 = vmatprep.subr.bf16.mxu0 0
  %109 = vmatpush1.bf16.msra.mxu0 0
  %110 = vmatprep.subr.bf16.mxu0 0
  %111 = vmatpush1.bf16.msra.mxu0 0
  %112 = vmatprep.mubr.bf16.mxu0 0
  %113 = vmatmul.mubr.bf16.gmra.mrb[0].mxu0 %v62
  %v114 = vpop.f32.mrb[0].mxu0
  %v115 = vadd.f32 0.0, %v114
  %v116 = vpop.f32.mrb[0].mxu0
  %v117 = vadd.f32 0.0, %v116
  %v118 = vpop.f32.mrb[0].mxu0
  %v119 = vpop.f32.mrb[0].mxu0
  %120 = vdwg.mxu0
  %121 = vmatprep.subr.bf16.mxu0 %v51
  %122 = vmatpush1.bf16.msra.mxu0 %v50
  %123 = vmatprep.subr.bf16.mxu0 %v78
  %124 = vmatpush1.bf16.msra.mxu0 %v75
  %125 = vmatprep.subr.bf16.mxu0 0
  %126 = vmatpush1.bf16.msra.mxu0 0
  %127 = vmatprep.subr.bf16.mxu0 0
  %128 = vmatpush1.bf16.msra.mxu0 0
  %129 = vmatprep.subr.bf16.mxu0 0
  %130 = vmatpush1.bf16.msra.mxu0 0
  %131 = vmatprep.subr.bf16.mxu0 0
  %132 = vmatpush1.bf16.msra.mxu0 0
  %133 = vmatprep.subr.bf16.mxu0 0
  %134 = vmatpush1.bf16.msra.mxu0 0
  %135 = vmatprep.subr.bf16.mxu0 0
  %136 = vmatpush1.bf16.msra.mxu0 0
  %137 = vmatprep.subr.bf16.mxu0 0
  %138 = vmatpush1.bf16.msra.mxu0 0
  %139 = vmatprep.subr.bf16.mxu0 0
  %140 = vmatpush1.bf16.msra.mxu0 0
  %141 = vmatprep.subr.bf16.mxu0 0
  %142 = vmatpush1.bf16.msra.mxu0 0
  %143 = vmatprep.subr.bf16.mxu0 0
  %144 = vmatpush1.bf16.msra.mxu0 0
  %145 = vmatprep.subr.bf16.mxu0 0
  %146 = vmatpush1.bf16.msra.mxu0 0
  %147 = vmatprep.subr.bf16.mxu0 0
  %148 = vmatpush1.bf16.msra.mxu0 0
  %149 = vmatprep.subr.bf16.mxu0 0
  %150 = vmatpush1.bf16.msra.mxu0 0
  %151 = vmatprep.subr.bf16.mxu0 0
  %152 = vmatpush1.bf16.msra.mxu0 0
  %153 = vmatprep.mubr.bf16.mxu0 0
  %154 = vmatmul.mubr.bf16.gmra.mrb[0].mxu0 %v62
  %v155 = vpop.f32.mrb[0].mxu0
  %v156 = vadd.f32 0.0, %v155
  %v157 = vpop.f32.mrb[0].mxu0
  %v158 = vadd.f32 0.0, %v157
  %v159 = vpop.f32.mrb[0].mxu0
  %v160 = vpop.f32.mrb[0].mxu0
  %161 = vdwg.mxu0
  %s162 = scalar_lea.vmem %s0, 64
  %v163 = vld [vmem:[%s162] sm:$0xff]
  %v164 = vld [vmem:[%s162 + $0x8] sm:$0xff]
  %v165 = vld [vmem:[%s162 + $0x10] sm:$0xff]
  %v166 = vld [vmem:[%s162 + $0x18] sm:$0xff]
  %v167 = vld [vmem:[%s162 + $0x20] sm:$0xff]
  %v168 = vld [vmem:[%s162 + $0x28] sm:$0xff]
  %v169 = vld [vmem:[%s162 + $0x30] sm:$0x11]
  %v170 = vld [vmem:[%s162 + $0x38] sm:$0x11]
  %v179 = vunpack.c.l.b16 %v163
  %v180 = vunpack.c.h.b16 %v163
  %v181 = vunpack.c.l.b16 %v164
  %v182 = vunpack.c.h.b16 %v164
  %v183 = vunpack.c.l.b16 %v165
  %v184 = vunpack.c.h.b16 %v165
  %v185 = vunpack.c.l.b16 %v166
  %v186 = vunpack.c.h.b16 %v166
  %v187 = vunpack.c.l.b16 %v167
  %v188 = vunpack.c.h.b16 %v167
  %v189 = vunpack.c.l.b16 %v168
  %v190 = vunpack.c.h.b16 %v168
  %v191 = vunpack.c.l.b16 %v169
  %v192 = vunpack.c.h.b16 %v169
  %v193 = vunpack.c.l.b16 %v170
  %v194 = vunpack.c.h.b16 %v170
  %v195 = vpack.c.b16 %v183, %v179
  %v196 = vpack.c.b16 %v184, %v180
  %v197 = vpack.c.b16 %v185, %v181
  %v198 = vpack.c.b16 %v186, %v182
  %v199 = vpack.c.b16 %v191, %v187
  %v200 = vpack.c.b16 %v192, %v188
  %v201 = vpack.c.b16 %v193, %v189
  %v202 = vpack.c.b16 %v194, %v190
  %v208 = vand.u32 %v199, %v67
  %v211 = vand.u32 %v200, %v67
  %v214 = vand.u32 %v201, %v67
  %v217 = vand.u32 %v202, %v67
  %219 = vmatprep.subr.bf16.mxu0 %v196
  %220 = vmatpush1.bf16.msra.mxu0 %v195
  %221 = vmatprep.subr.bf16.mxu0 %v211
  %222 = vmatpush1.bf16.msra.mxu0 %v208
  %223 = vmatprep.subr.bf16.mxu0 0
  %224 = vmatpush1.bf16.msra.mxu0 0
  %225 = vmatprep.subr.bf16.mxu0 0
  %226 = vmatpush1.bf16.msra.mxu0 0
  %227 = vmatprep.subr.bf16.mxu0 0
  %228 = vmatpush1.bf16.msra.mxu0 0
  %229 = vmatprep.subr.bf16.mxu0 0
  %230 = vmatpush1.bf16.msra.mxu0 0
  %231 = vmatprep.subr.bf16.mxu0 0
  %232 = vmatpush1.bf16.msra.mxu0 0
  %233 = vmatprep.subr.bf16.mxu0 0
  %234 = vmatpush1.bf16.msra.mxu0 0
  %235 = vmatprep.subr.bf16.mxu0 0
  %236 = vmatpush1.bf16.msra.mxu0 0
  %237 = vmatprep.subr.bf16.mxu0 0
  %238 = vmatpush1.bf16.msra.mxu0 0
  %239 = vmatprep.subr.bf16.mxu0 0
  %240 = vmatpush1.bf16.msra.mxu0 0
  %241 = vmatprep.subr.bf16.mxu0 0
  %242 = vmatpush1.bf16.msra.mxu0 0
  %243 = vmatprep.subr.bf16.mxu0 0
  %244 = vmatpush1.bf16.msra.mxu0 0
  %245 = vmatprep.subr.bf16.mxu0 0
  %246 = vmatpush1.bf16.msra.mxu0 0
  %247 = vmatprep.subr.bf16.mxu0 0
  %248 = vmatpush1.bf16.msra.mxu0 0
  %249 = vmatprep.subr.bf16.mxu0 0
  %250 = vmatpush1.bf16.msra.mxu0 0
  %251 = vmatprep.mubr.bf16.mxu0 0
  %252 = vmatmul.mubr.bf16.gmra.mrb[0].mxu0 %v62
  %v253 = vpop.f32.mrb[0].mxu0
  %v254 = vadd.f32 0.0, %v253
  %v255 = vpop.f32.mrb[0].mxu0
  %v256 = vadd.f32 0.0, %v255
  %v257 = vpop.f32.mrb[0].mxu0
  %v258 = vpop.f32.mrb[0].mxu0
  %259 = vdwg.mxu0
  %260 = vmatprep.subr.bf16.mxu0 %v198
  %261 = vmatpush1.bf16.msra.mxu0 %v197
  %262 = vmatprep.subr.bf16.mxu0 %v217
  %263 = vmatpush1.bf16.msra.mxu0 %v214
  %264 = vmatprep.subr.bf16.mxu0 0
  %265 = vmatpush1.bf16.msra.mxu0 0
  %266 = vmatprep.subr.bf16.mxu0 0
  %267 = vmatpush1.bf16.msra.mxu0 0
  %268 = vmatprep.subr.bf16.mxu0 0
  %269 = vmatpush1.bf16.msra.mxu0 0
  %270 = vmatprep.subr.bf16.mxu0 0
  %271 = vmatpush1.bf16.msra.mxu0 0
  %272 = vmatprep.subr.bf16.mxu0 0
  %273 = vmatpush1.bf16.msra.mxu0 0
  %274 = vmatprep.subr.bf16.mxu0 0
  %275 = vmatpush1.bf16.msra.mxu0 0
  %276 = vmatprep.subr.bf16.mxu0 0
  %277 = vmatpush1.bf16.msra.mxu0 0
  %278 = vmatprep.subr.bf16.mxu0 0
  %279 = vmatpush1.bf16.msra.mxu0 0
  %280 = vmatprep.subr.bf16.mxu0 0
  %281 = vmatpush1.bf16.msra.mxu0 0
  %282 = vmatprep.subr.bf16.mxu0 0
  %283 = vmatpush1.bf16.msra.mxu0 0
  %284 = vmatprep.subr.bf16.mxu0 0
  %285 = vmatpush1.bf16.msra.mxu0 0
  %286 = vmatprep.subr.bf16.mxu0 0
  %287 = vmatpush1.bf16.msra.mxu0 0
  %288 = vmatprep.subr.bf16.mxu0 0
  %289 = vmatpush1.bf16.msra.mxu0 0
  %290 = vmatprep.subr.bf16.mxu0 0
  %291 = vmatpush1.bf16.msra.mxu0 0
  %292 = vmatprep.mubr.bf16.mxu0 0
  %293 = vmatmul.mubr.bf16.gmra.mrb[0].mxu0 %v62
  %v294 = vpop.f32.mrb[0].mxu0
  %v295 = vadd.f32 0.0, %v294
  %v296 = vpop.f32.mrb[0].mxu0
  %v297 = vadd.f32 0.0, %v296
  %v298 = vpop.f32.mrb[0].mxu0
  %v299 = vpop.f32.mrb[0].mxu0
  %300 = vdwg.mxu0
  %v301 = vmax.f32 %v115, %v254
  %v302 = vmax.f32 %v117, %v256
  %v303 = vmax.f32 %v156, %v295
  %v304 = vmax.f32 %v158, %v297
  %s305 = scalar_lea.vmem %s0, 128
  %v306 = vld [vmem:[%s305] sm:$0xff]
  %v307 = vld [vmem:[%s305 + $0x8] sm:$0xff]
  %v308 = vld [vmem:[%s305 + $0x10] sm:$0xff]
  %v309 = vld [vmem:[%s305 + $0x18] sm:$0xff]
  %v310 = vld [vmem:[%s305 + $0x20] sm:$0xff]
  %v311 = vld [vmem:[%s305 + $0x28] sm:$0xff]
  %v312 = vld [vmem:[%s305 + $0x30] sm:$0x11]
  %v313 = vld [vmem:[%s305 + $0x38] sm:$0x11]
  %v322 = vunpack.c.l.b16 %v306
  %v323 = vunpack.c.h.b16 %v306
  %v324 = vunpack.c.l.b16 %v307
  %v325 = vunpack.c.h.b16 %v307
  %v326 = vunpack.c.l.b16 %v308
  %v327 = vunpack.c.h.b16 %v308
  %v328 = vunpack.c.l.b16 %v309
  %v329 = vunpack.c.h.b16 %v309
  %v330 = vunpack.c.l.b16 %v310
  %v331 = vunpack.c.h.b16 %v310
  %v332 = vunpack.c.l.b16 %v311
  %v333 = vunpack.c.h.b16 %v311
  %v334 = vunpack.c.l.b16 %v312
  %v335 = vunpack.c.h.b16 %v312
  %v336 = vunpack.c.l.b16 %v313
  %v337 = vunpack.c.h.b16 %v313
  %v338 = vpack.c.b16 %v326, %v322
  %v339 = vpack.c.b16 %v327, %v323
  %v340 = vpack.c.b16 %v328, %v324
  %v341 = vpack.c.b16 %v329, %v325
  %v342 = vpack.c.b16 %v334, %v330
  %v343 = vpack.c.b16 %v335, %v331
  %v344 = vpack.c.b16 %v336, %v332
  %v345 = vpack.c.b16 %v337, %v333
  %v351 = vand.u32 %v342, %v67
  %v354 = vand.u32 %v343, %v67
  %v357 = vand.u32 %v344, %v67
  %v360 = vand.u32 %v345, %v67
  %362 = vmatprep.subr.bf16.mxu0 %v339
  %363 = vmatpush1.bf16.msra.mxu0 %v338
  %364 = vmatprep.subr.bf16.mxu0 %v354
  %365 = vmatpush1.bf16.msra.mxu0 %v351
  %366 = vmatprep.subr.bf16.mxu0 0
  %367 = vmatpush1.bf16.msra.mxu0 0
  %368 = vmatprep.subr.bf16.mxu0 0
  %369 = vmatpush1.bf16.msra.mxu0 0
  %370 = vmatprep.subr.bf16.mxu0 0
  %371 = vmatpush1.bf16.msra.mxu0 0
  %372 = vmatprep.subr.bf16.mxu0 0
  %373 = vmatpush1.bf16.msra.mxu0 0
  %374 = vmatprep.subr.bf16.mxu0 0
  %375 = vmatpush1.bf16.msra.mxu0 0
  %376 = vmatprep.subr.bf16.mxu0 0
  %377 = vmatpush1.bf16.msra.mxu0 0
  %378 = vmatprep.subr.bf16.mxu0 0
  %379 = vmatpush1.bf16.msra.mxu0 0
  %380 = vmatprep.subr.bf16.mxu0 0
  %381 = vmatpush1.bf16.msra.mxu0 0
  %382 = vmatprep.subr.bf16.mxu0 0
  %383 = vmatpush1.bf16.msra.mxu0 0
  %384 = vmatprep.subr.bf16.mxu0 0
  %385 = vmatpush1.bf16.msra.mxu0 0
  %386 = vmatprep.subr.bf16.mxu0 0
  %387 = vmatpush1.bf16.msra.mxu0 0
  %388 = vmatprep.subr.bf16.mxu0 0
  %389 = vmatpush1.bf16.msra.mxu0 0
  %390 = vmatprep.subr.bf16.mxu0 0
  %391 = vmatpush1.bf16.msra.mxu0 0
  %392 = vmatprep.subr.bf16.mxu0 0
  %393 = vmatpush1.bf16.msra.mxu0 0
  %394 = vmatprep.mubr.bf16.mxu0 0
  %395 = vmatmul.mubr.bf16.gmra.mrb[0].mxu0 %v62
  %v396 = vpop.f32.mrb[0].mxu0
  %v397 = vadd.f32 0.0, %v396
  %v398 = vpop.f32.mrb[0].mxu0
  %v399 = vadd.f32 0.0, %v398
  %v400 = vpop.f32.mrb[0].mxu0
  %v401 = vpop.f32.mrb[0].mxu0
  %402 = vdwg.mxu0
  %403 = vmatprep.subr.bf16.mxu0 %v341
  %404 = vmatpush1.bf16.msra.mxu0 %v340
  %405 = vmatprep.subr.bf16.mxu0 %v360
  %406 = vmatpush1.bf16.msra.mxu0 %v357
  %407 = vmatprep.subr.bf16.mxu0 0
  %408 = vmatpush1.bf16.msra.mxu0 0
  %409 = vmatprep.subr.bf16.mxu0 0
  %410 = vmatpush1.bf16.msra.mxu0 0
  %411 = vmatprep.subr.bf16.mxu0 0
  %412 = vmatpush1.bf16.msra.mxu0 0
  %413 = vmatprep.subr.bf16.mxu0 0
  %414 = vmatpush1.bf16.msra.mxu0 0
  %415 = vmatprep.subr.bf16.mxu0 0
  %416 = vmatpush1.bf16.msra.mxu0 0
  %417 = vmatprep.subr.bf16.mxu0 0
  %418 = vmatpush1.bf16.msra.mxu0 0
  %419 = vmatprep.subr.bf16.mxu0 0
  %420 = vmatpush1.bf16.msra.mxu0 0
  %421 = vmatprep.subr.bf16.mxu0 0
  %422 = vmatpush1.bf16.msra.mxu0 0
  %423 = vmatprep.subr.bf16.mxu0 0
  %424 = vmatpush1.bf16.msra.mxu0 0
  %425 = vmatprep.subr.bf16.mxu0 0
  %426 = vmatpush1.bf16.msra.mxu0 0
  %427 = vmatprep.subr.bf16.mxu0 0
  %428 = vmatpush1.bf16.msra.mxu0 0
  %429 = vmatprep.subr.bf16.mxu0 0
  %430 = vmatpush1.bf16.msra.mxu0 0
  %431 = vmatprep.subr.bf16.mxu0 0
  %432 = vmatpush1.bf16.msra.mxu0 0
  %433 = vmatprep.subr.bf16.mxu0 0
  %434 = vmatpush1.bf16.msra.mxu0 0
  %435 = vmatprep.mubr.bf16.mxu0 0
  %436 = vmatmul.mubr.bf16.gmra.mrb[0].mxu0 %v62
  %v437 = vpop.f32.mrb[0].mxu0
  %v438 = vadd.f32 0.0, %v437
  %v439 = vpop.f32.mrb[0].mxu0
  %v440 = vadd.f32 0.0, %v439
  %v441 = vpop.f32.mrb[0].mxu0
  %v442 = vpop.f32.mrb[0].mxu0
  %443 = vdwg.mxu0
  %v444 = vmax.f32 %v301, %v397
  %v445 = vmax.f32 %v302, %v399
  %v446 = vmax.f32 %v303, %v438
  %v447 = vmax.f32 %v304, %v440
  %s448 = scalar_lea.vmem %s0, 192
  %v449 = vld [vmem:[%s448] sm:$0xff]
  %v450 = vld [vmem:[%s448 + $0x8] sm:$0xff]
  %v451 = vld [vmem:[%s448 + $0x10] sm:$0xff]
  %v452 = vld [vmem:[%s448 + $0x18] sm:$0xff]
  %v453 = vld [vmem:[%s448 + $0x20] sm:$0xff]
  %v454 = vld [vmem:[%s448 + $0x28] sm:$0xff]
  %v455 = vld [vmem:[%s448 + $0x30] sm:$0x11]
  %v456 = vld [vmem:[%s448 + $0x38] sm:$0x11]
  %v465 = vunpack.c.l.b16 %v449
  %v466 = vunpack.c.h.b16 %v449
  %v467 = vunpack.c.l.b16 %v450
  %v468 = vunpack.c.h.b16 %v450
  %v469 = vunpack.c.l.b16 %v451
  %v470 = vunpack.c.h.b16 %v451
  %v471 = vunpack.c.l.b16 %v452
  %v472 = vunpack.c.h.b16 %v452
  %v473 = vunpack.c.l.b16 %v453
  %v474 = vunpack.c.h.b16 %v453
  %v475 = vunpack.c.l.b16 %v454
  %v476 = vunpack.c.h.b16 %v454
  %v477 = vunpack.c.l.b16 %v455
  %v478 = vunpack.c.h.b16 %v455
  %v479 = vunpack.c.l.b16 %v456
  %v480 = vunpack.c.h.b16 %v456
  %v481 = vpack.c.b16 %v469, %v465
  %v482 = vpack.c.b16 %v470, %v466
  %v483 = vpack.c.b16 %v471, %v467
  %v484 = vpack.c.b16 %v472, %v468
  %v485 = vpack.c.b16 %v477, %v473
  %v486 = vpack.c.b16 %v478, %v474
  %v487 = vpack.c.b16 %v479, %v475
  %v488 = vpack.c.b16 %v480, %v476
  %v494 = vand.u32 %v485, %v67
  %v497 = vand.u32 %v486, %v67
  %v500 = vand.u32 %v487, %v67
  %v503 = vand.u32 %v488, %v67
  %505 = vmatprep.subr.bf16.mxu0 %v482
  %506 = vmatpush1.bf16.msra.mxu0 %v481
  %507 = vmatprep.subr.bf16.mxu0 %v497
  %508 = vmatpush1.bf16.msra.mxu0 %v494
  %509 = vmatprep.subr.bf16.mxu0 0
  %510 = vmatpush1.bf16.msra.mxu0 0
  %511 = vmatprep.subr.bf16.mxu0 0
  %512 = vmatpush1.bf16.msra.mxu0 0
  %513 = vmatprep.subr.bf16.mxu0 0
  %514 = vmatpush1.bf16.msra.mxu0 0
  %515 = vmatprep.subr.bf16.mxu0 0
  %516 = vmatpush1.bf16.msra.mxu0 0
  %517 = vmatprep.subr.bf16.mxu0 0
  %518 = vmatpush1.bf16.msra.mxu0 0
  %519 = vmatprep.subr.bf16.mxu0 0
  %520 = vmatpush1.bf16.msra.mxu0 0
  %521 = vmatprep.subr.bf16.mxu0 0
  %522 = vmatpush1.bf16.msra.mxu0 0
  %523 = vmatprep.subr.bf16.mxu0 0
  %524 = vmatpush1.bf16.msra.mxu0 0
  %525 = vmatprep.subr.bf16.mxu0 0
  %526 = vmatpush1.bf16.msra.mxu0 0
  %527 = vmatprep.subr.bf16.mxu0 0
  %528 = vmatpush1.bf16.msra.mxu0 0
  %529 = vmatprep.subr.bf16.mxu0 0
  %530 = vmatpush1.bf16.msra.mxu0 0
  %531 = vmatprep.subr.bf16.mxu0 0
  %532 = vmatpush1.bf16.msra.mxu0 0
  %533 = vmatprep.subr.bf16.mxu0 0
  %534 = vmatpush1.bf16.msra.mxu0 0
  %535 = vmatprep.subr.bf16.mxu0 0
  %536 = vmatpush1.bf16.msra.mxu0 0
  %537 = vmatprep.mubr.bf16.mxu0 0
  %538 = vmatmul.mubr.bf16.gmra.mrb[0].mxu0 %v62
  %v539 = vpop.f32.mrb[0].mxu0
  %v540 = vadd.f32 0.0, %v539
  %v541 = vpop.f32.mrb[0].mxu0
  %v542 = vadd.f32 0.0, %v541
  %v543 = vpop.f32.mrb[0].mxu0
  %v544 = vpop.f32.mrb[0].mxu0
  %545 = vdwg.mxu0
  %546 = vmatprep.subr.bf16.mxu0 %v484
  %547 = vmatpush1.bf16.msra.mxu0 %v483
  %548 = vmatprep.subr.bf16.mxu0 %v503
  %549 = vmatpush1.bf16.msra.mxu0 %v500
  %550 = vmatprep.subr.bf16.mxu0 0
  %551 = vmatpush1.bf16.msra.mxu0 0
  %552 = vmatprep.subr.bf16.mxu0 0
  %553 = vmatpush1.bf16.msra.mxu0 0
  %554 = vmatprep.subr.bf16.mxu0 0
  %555 = vmatpush1.bf16.msra.mxu0 0
  %556 = vmatprep.subr.bf16.mxu0 0
  %557 = vmatpush1.bf16.msra.mxu0 0
  %558 = vmatprep.subr.bf16.mxu0 0
  %559 = vmatpush1.bf16.msra.mxu0 0
  %560 = vmatprep.subr.bf16.mxu0 0
  %561 = vmatpush1.bf16.msra.mxu0 0
  %562 = vmatprep.subr.bf16.mxu0 0
  %563 = vmatpush1.bf16.msra.mxu0 0
  %564 = vmatprep.subr.bf16.mxu0 0
  %565 = vmatpush1.bf16.msra.mxu0 0
  %566 = vmatprep.subr.bf16.mxu0 0
  %567 = vmatpush1.bf16.msra.mxu0 0
  %568 = vmatprep.subr.bf16.mxu0 0
  %569 = vmatpush1.bf16.msra.mxu0 0
  %570 = vmatprep.subr.bf16.mxu0 0
  %571 = vmatpush1.bf16.msra.mxu0 0
  %572 = vmatprep.subr.bf16.mxu0 0
  %573 = vmatpush1.bf16.msra.mxu0 0
  %574 = vmatprep.subr.bf16.mxu0 0
  %575 = vmatpush1.bf16.msra.mxu0 0
  %576 = vmatprep.subr.bf16.mxu0 0
  %577 = vmatpush1.bf16.msra.mxu0 0
  %578 = vmatprep.mubr.bf16.mxu0 0
  %579 = vmatmul.mubr.bf16.gmra.mrb[0].mxu0 %v62
  %v580 = vpop.f32.mrb[0].mxu0
  %v581 = vadd.f32 0.0, %v580
  %v582 = vpop.f32.mrb[0].mxu0
  %v583 = vadd.f32 0.0, %v582
  %v584 = vpop.f32.mrb[0].mxu0
  %v585 = vpop.f32.mrb[0].mxu0
  %586 = vdwg.mxu0
  %v587 = vmax.f32 %v444, %v540
  %v588 = vmax.f32 %v445, %v542
  %v589 = vmax.f32 %v446, %v581
  %v590 = vmax.f32 %v447, %v583
  %v591 = vld [vmem:[%s2] sm:$0x3f]
  %593 = vset.pattern.permute.xlu0 0
  %594 = vperm.xlu0 %593, %v591
  %v595 = vpop.permute.xlu0 %594
  %v597 = vadd.f32 %v587, %v595
  %v598 = vadd.f32 %v588, %v595
  %v599 = vadd.f32 %v589, %v595
  %v600 = vadd.f32 %v590, %v595
  %v601 = vmax.f32 %v597, 0.0
  %v602 = vmax.f32 %v598, 0.0
  %v603 = vmax.f32 %v599, 0.0
  %v604 = vmax.f32 %v600, 0.0
  %605 = vst [vmem:[%s3] sm:$0x3f] %v601
  %606 = vst [vmem:[%s3 + $0x8] sm:$0x3f] %v602
  %607 = vst [vmem:[%s3 + $0x10] sm:$0x3f] %v603
  %vm608 = vcmask 62464
  %609 = vst.msk [vmem:[%s3 + $0x18] sm:$0x3f] %vm608, %v604
  // Predicated region
  $region14: #{lenet_frame_frontend.2} parent=0 // pred_check
    _
  $region15: #{lenet_frame_frontend.2} parent=0 // pred_check_branch
    %611 = sbr.rel (0) target = $region17
  $region16: #{lenet_frame_frontend.2} parent=0 // pred_region
    _
  $region17: #{lenet_frame_frontend.2} parent=0 // pred_fallthru
    _
  // Predicated region
  $region18: #{lenet_frame_frontend.2} parent=0 // pred_check
    _
  $region19: #{lenet_frame_frontend.2} parent=0 // pred_check_branch
    %613 = sbr.rel (0) target = $region21
  $region20: #{lenet_frame_frontend.2} parent=0 // pred_region
    _
  $region21: #{lenet_frame_frontend.2} parent=0 // pred_fallthru
    _

// kernel: lenet_frame_frontend.3
$region0: #{lenet_frame_frontend.3}
  #allocation0 [shape = 'u32[]', space=smem, size = 0x4, offset = 0x4, fixed_abs, tag = 'smem constant byte address 0x4 - core index']
  #allocation1 [shape = 'u32[144,128]{1,0:T(1,128)}', space=vmem, size = 0x12000, scoped, tag = 'internal scratch']
  %s0 = inlined_call_operand.vmem [shape: bf16[4,150,50], index: 0, kind: input, shape index: {}]
  %s1 = inlined_call_operand.vmem [shape: bf16[32,150], index: 1, kind: input, shape index: {}]
  %s2 = inlined_call_operand.vmem [shape: f32[32,1], index: 2, kind: input, shape index: {}]
  %s3 = inlined_call_operand.vmem [shape: f32[16,50], index: 3, kind: output, shape index: {}]
  %s4 = sld [smem:[#allocation0]]
  $region22: #{lenet_frame_frontend.3} parent=0
    _
  %s6 = ssub.s32 1, %s4
  %s7 = scalar_select 0, %s6, %s4
  // Predicated region
  $region2: #{lenet_frame_frontend.3} parent=0 // pred_check
    _
  $region3: #{lenet_frame_frontend.3} parent=0 // pred_check_branch
    %9 = sbr.rel (0) target = $region5
  $region4: #{lenet_frame_frontend.3} parent=0 // pred_region
    _
  $region5: #{lenet_frame_frontend.3} parent=0 // pred_fallthru
    _
  // Predicated region
  $region6: #{lenet_frame_frontend.3} parent=0 // pred_check
    _
  $region7: #{lenet_frame_frontend.3} parent=0 // pred_check_branch
    %11 = sbr.rel (0) target = $region9
  $region8: #{lenet_frame_frontend.3} parent=0 // pred_region
    _
  $region9: #{lenet_frame_frontend.3} parent=0 // pred_fallthru
    _
  // Predicated region
  $region10: #{lenet_frame_frontend.3} parent=0 // pred_check
    _
  $region11: #{lenet_frame_frontend.3} parent=0 // pred_check_branch
    %13 = sbr.rel (0) target = $region13
  $region12: #{lenet_frame_frontend.3} parent=0 // pred_region
    _
  $region13: #{lenet_frame_frontend.3} parent=0 // pred_fallthru
    _
  %v15 = vld [vmem:[%s1] sm:$0xff]
  %v16 = vld [vmem:[%s1 + $0x8] sm:$0xff]
  %v17 = vld [vmem:[%s1 + $0x10] sm:$0xff]
  %v18 = vld [vmem:[%s1 + $0x18] sm:$0xff]
  %v19 = vld [vmem:[%s0] sm:$0xf]
  %v20 = vld [vmem:[%s0 + $0x4] sm:$0xf]
  %v21 = vld [vmem:[%s0 + $0x8] sm:$0xf]
  %v22 = vld [vmem:[%s0 + $0xc] sm:$0xf]
  %v23 = vld [vmem:[%s0 + $0x10] sm:$0xf]
  %v24 = vld [vmem:[%s0 + $0x14] sm:$0xf]
  %v25 = vld [vmem:[%s0 + $0x18] sm:$0xf]
  %v26 = vld [vmem:[%s0 + $0x1c] sm:$0xf]
  %v27 = vld [vmem:[%s0 + $0x20] sm:$0xf]
  %v28 = vld [vmem:[%s0 + $0x24] sm:$0xf]
  %v29 = vld [vmem:[%s0 + $0x28] sm:$0xf]
  %v30 = vld [vmem:[%s0 + $0x2c] sm:$0xf]
  %v31 = vld [vmem:[%s0 + $0x30] sm:$0xf]
  %v32 = vld [vmem:[%s0 + $0x34] sm:$0xf]
  %v33 = vld [vmem:[%s0 + $0x38] sm:$0xf]
  %v34 = vld [vmem:[%s0 + $0x3c] sm:$0xf]
  %v35 = vld [vmem:[%s0 + $0x40] sm:$0xf]
  %v36 = vld [vmem:[%s0 + $0x44] sm:$0xf]
  %v37 = vld [vmem:[%s0 + $0x48] sm:$0x7]
  %v42 = vunpack.c.l.b16 %v15
  %v43 = vunpack.c.h.b16 %v15
  %v44 = vunpack.c.l.b16 %v16
  %v45 = vunpack.c.h.b16 %v16
  %v46 = vunpack.c.l.b16 %v17
  %v47 = vunpack.c.h.b16 %v17
  %v48 = vunpack.c.l.b16 %v18
  %v49 = vunpack.c.h.b16 %v18
  %v50 = vpack.c.b16 %v44, %v42
  %v51 = vpack.c.b16 %v45, %v43
  %v52 = vpack.c.b16 %v48, %v46
  %v53 = vpack.c.b16 %v49, %v47
  %v75 = vunpack.c.l.b16 %v19
  %v76 = vunpack.c.l.b16 %v20
  %v77 = vunpack.c.l.b16 %v21
  %v78 = vunpack.c.l.b16 %v22
  %v79 = vunpack.c.l.b16 %v23
  %v80 = vunpack.c.l.b16 %v24
  %v81 = vunpack.c.l.b16 %v25
  %v82 = vunpack.c.l.b16 %v26
  %v83 = vunpack.c.l.b16 %v27
  %v84 = vunpack.c.l.b16 %v28
  %v85 = vunpack.c.l.b16 %v29
  %v86 = vunpack.c.l.b16 %v30
  %v87 = vunpack.c.l.b16 %v31
  %v88 = vunpack.c.l.b16 %v32
  %v89 = vunpack.c.l.b16 %v33
  %v90 = vunpack.c.l.b16 %v34
  %v91 = vunpack.c.l.b16 %v35
  %v92 = vunpack.c.l.b16 %v36
  %v93 = vunpack.c.l.b16 %v37
  %v94 = vpack.c.b16 %v76, %v75
  %v95 = vpack.c.b16 %v78, %v77
  %v96 = vpack.c.b16 %v80, %v79
  %v97 = vpack.c.b16 %v82, %v81
  %v98 = vpack.c.b16 %v84, %v83
  %v99 = vpack.c.b16 %v86, %v85
  %v100 = vpack.c.b16 %v88, %v87
  %v101 = vpack.c.b16 %v90, %v89
  %v102 = vpack.c.b16 %v92, %v91
  %v103 = vpack.c.b16 %v93, %v93
  %vm113 = vcmask 179200
  %v115 = vsel %vm113, %v51, 0
  %v118 = vsel %vm113, %v53, 0
  %vm120 = vcmask 1042432
  %v122 = vsel %vm120, %v103, 0
  %124 = vmatprep.subr.bf16.mxu0 0
  %125 = vmatpush1.bf16.msra.mxu0 %v94
  %126 = vmatprep.subr.bf16.mxu0 0
  %127 = vmatpush1.bf16.msra.mxu0 %v95
  %128 = vmatprep.subr.bf16.mxu0 0
  %129 = vmatpush1.bf16.msra.mxu0 %v96
  %130 = vmatprep.subr.bf16.mxu0 0
  %131 = vmatpush1.bf16.msra.mxu0 %v97
  %132 = vmatprep.subr.bf16.mxu0 0
  %133 = vmatpush1.bf16.msra.mxu0 %v98
  %134 = vmatprep.subr.bf16.mxu0 0
  %135 = vmatpush1.bf16.msra.mxu0 %v99
  %136 = vmatprep.subr.bf16.mxu0 0
  %137 = vmatpush1.bf16.msra.mxu0 %v100
  %138 = vmatprep.subr.bf16.mxu0 0
  %139 = vmatpush1.bf16.msra.mxu0 %v101
  %140 = vmatprep.subr.bf16.mxu0 0
  %141 = vmatpush1.bf16.msra.mxu0 %v102
  %142 = vmatprep.subr.bf16.mxu0 0
  %143 = vmatpush1.bf16.msra.mxu0 %v122
  %144 = vmatprep.subr.bf16.mxu0 0
  %145 = vmatpush1.bf16.msra.mxu0 0
  %146 = vmatprep.subr.bf16.mxu0 0
  %147 = vmatpush1.bf16.msra.mxu0 0
  %148 = vmatprep.subr.bf16.mxu0 0
  %149 = vmatpush1.bf16.msra.mxu0 0
  %150 = vmatprep.subr.bf16.mxu0 0
  %151 = vmatpush1.bf16.msra.mxu0 0
  %152 = vmatprep.subr.bf16.mxu0 0
  %153 = vmatpush1.bf16.msra.mxu0 0
  %154 = vmatprep.subr.bf16.mxu0 0
  %155 = vmatpush1.bf16.msra.mxu0 0
  %156 = vmatprep.mubr.bf16.mxu0 %v115
  %157 = vmatmul.mubr.bf16.gmra.mrb[0].mxu0 %v50
  %v158 = vpop.f32.mrb[0].mxu0
  %v159 = vadd.f32 0.0, %v158
  %v160 = vpop.f32.mrb[0].mxu0
  %v161 = vpop.f32.mrb[0].mxu0
  %v162 = vadd.f32 0.0, %v161
  %v163 = vpop.f32.mrb[0].mxu0
  %164 = vmatprep.mubr.bf16.mxu0 %v118
  %165 = vmatmul.mubr.bf16.gmra.mrb[0].mxu0 %v52
  %v166 = vpop.f32.mrb[0].mxu0
  %v167 = vadd.f32 0.0, %v166
  %v168 = vpop.f32.mrb[0].mxu0
  %v169 = vpop.f32.mrb[0].mxu0
  %v170 = vadd.f32 0.0, %v169
  %v171 = vpop.f32.mrb[0].mxu0
  %172 = vdwg.mxu0
  %s173 = scalar_lea.vmem %s0, 76
  %v174 = vld [vmem:[%s173] sm:$0xf]
  %v175 = vld [vmem:[%s173 + $0x4] sm:$0xf]
  %v176 = vld [vmem:[%s173 + $0x8] sm:$0xf]
  %v177 = vld [vmem:[%s173 + $0xc] sm:$0xf]
  %v178 = vld [vmem:[%s173 + $0x10] sm:$0xf]
  %v179 = vld [vmem:[%s173 + $0x14] sm:$0xf]
  %v180 = vld [vmem:[%s173 + $0x18] sm:$0xf]
  %v181 = vld [vmem:[%s173 + $0x1c] sm:$0xf]
  %v182 = vld [vmem:[%s173 + $0x20] sm:$0xf]
  %v183 = vld [vmem:[%s173 + $0x24] sm:$0xf]
  %v184 = vld [vmem:[%s173 + $0x28] sm:$0xf]
  %v185 = vld [vmem:[%s173 + $0x2c] sm:$0xf]
  %v186 = vld [vmem:[%s173 + $0x30] sm:$0xf]
  %v187 = vld [vmem:[%s173 + $0x34] sm:$0xf]
  %v188 = vld [vmem:[%s173 + $0x38] sm:$0xf]
  %v189 = vld [vmem:[%s173 + $0x3c] sm:$0xf]
  %v190 = vld [vmem:[%s173 + $0x40] sm:$0xf]
  %v191 = vld [vmem:[%s173 + $0x44] sm:$0xf]
  %v192 = vld [vmem:[%s173 + $0x48] sm:$0x7]
  %v212 = vunpack.c.l.b16 %v174
  %v213 = vunpack.c.l.b16 %v175
  %v214 = vunpack.c.l.b16 %v176
  %v215 = vunpack.c.l.b16 %v177
  %v216 = vunpack.c.l.b16 %v178
  %v217 = vunpack.c.l.b16 %v179
  %v218 = vunpack.c.l.b16 %v180
  %v219 = vunpack.c.l.b16 %v181
  %v220 = vunpack.c.l.b16 %v182
  %v221 = vunpack.c.l.b16 %v183
  %v222 = vunpack.c.l.b16 %v184
  %v223 = vunpack.c.l.b16 %v185
  %v224 = vunpack.c.l.b16 %v186
  %v225 = vunpack.c.l.b16 %v187
  %v226 = vunpack.c.l.b16 %v188
  %v227 = vunpack.c.l.b16 %v189
  %v228 = vunpack.c.l.b16 %v190
  %v229 = vunpack.c.l.b16 %v191
  %v230 = vunpack.c.l.b16 %v192
  %v231 = vpack.c.b16 %v213, %v212
  %v232 = vpack.c.b16 %v215, %v214
  %v233 = vpack.c.b16 %v217, %v216
  %v234 = vpack.c.b16 %v219, %v218
  %v235 = vpack.c.b16 %v221, %v220
  %v236 = vpack.c.b16 %v223, %v222
  %v237 = vpack.c.b16 %v225, %v224
  %v238 = vpack.c.b16 %v227, %v226
  %v239 = vpack.c.b16 %v229, %v228
  %v240 = vpack.c.b16 %v230, %v230
  %v251 = vsel %vm120, %v240, 0
  %253 = vmatprep.subr.bf16.mxu0 0
  %254 = vmatpush1.bf16.msra.mxu0 %v231
  %255 = vmatprep.subr.bf16.mxu0 0
  %256 = vmatpush1.bf16.msra.mxu0 %v232
  %257 = vmatprep.subr.bf16.mxu0 0
  %258 = vmatpush1.bf16.msra.mxu0 %v233
  %259 = vmatprep.subr.bf16.mxu0 0
  %260 = vmatpush1.bf16.msra.mxu0 %v234
  %261 = vmatprep.subr.bf16.mxu0 0
  %262 = vmatpush1.bf16.msra.mxu0 %v235
  %263 = vmatprep.subr.bf16.mxu0 0
  %264 = vmatpush1.bf16.msra.mxu0 %v236
  %265 = vmatprep.subr.bf16.mxu0 0
  %266 = vmatpush1.bf16.msra.mxu0 %v237
  %267 = vmatprep.subr.bf16.mxu0 0
  %268 = vmatpush1.bf16.msra.mxu0 %v238
  %269 = vmatprep.subr.bf16.mxu0 0
  %270 = vmatpush1.bf16.msra.mxu0 %v239
  %271 = vmatprep.subr.bf16.mxu0 0
  %272 = vmatpush1.bf16.msra.mxu0 %v251
  %273 = vmatprep.subr.bf16.mxu0 0
  %274 = vmatpush1.bf16.msra.mxu0 0
  %275 = vmatprep.subr.bf16.mxu0 0
  %276 = vmatpush1.bf16.msra.mxu0 0
  %277 = vmatprep.subr.bf16.mxu0 0
  %278 = vmatpush1.bf16.msra.mxu0 0
  %279 = vmatprep.subr.bf16.mxu0 0
  %280 = vmatpush1.bf16.msra.mxu0 0
  %281 = vmatprep.subr.bf16.mxu0 0
  %282 = vmatpush1.bf16.msra.mxu0 0
  %283 = vmatprep.subr.bf16.mxu0 0
  %284 = vmatpush1.bf16.msra.mxu0 0
  %285 = vmatprep.mubr.bf16.mxu0 %v115
  %286 = vmatmul.mubr.bf16.gmra.mrb[0].mxu0 %v50
  %v287 = vpop.f32.mrb[0].mxu0
  %v288 = vadd.f32 0.0, %v287
  %v289 = vpop.f32.mrb[0].mxu0
  %v290 = vpop.f32.mrb[0].mxu0
  %v291 = vadd.f32 0.0, %v290
  %v292 = vpop.f32.mrb[0].mxu0
  %293 = vmatprep.mubr.bf16.mxu0 %v118
  %294 = vmatmul.mubr.bf16.gmra.mrb[0].mxu0 %v52
  %v295 = vpop.f32.mrb[0].mxu0
  %v296 = vadd.f32 0.0, %v295
  %v297 = vpop.f32.mrb[0].mxu0
  %v298 = vpop.f32.mrb[0].mxu0
  %v299 = vadd.f32 0.0, %v298
  %v300 = vpop.f32.mrb[0].mxu0
  %301 = vdwg.mxu0
  %v302 = vmax.f32 %v159, %v288
  %v303 = vmax.f32 %v162, %v291
  %v304 = vmax.f32 %v167, %v296
  %v305 = vmax.f32 %v170, %v299
  %s306 = scalar_lea.vmem %s0, 152
  %v307 = vld [vmem:[%s306] sm:$0xf]
  %v308 = vld [vmem:[%s306 + $0x4] sm:$0xf]
  %v309 = vld [vmem:[%s306 + $0x8] sm:$0xf]
  %v310 = vld [vmem:[%s306 + $0xc] sm:$0xf]
  %v311 = vld [vmem:[%s306 + $0x10] sm:$0xf]
  %v312 = vld [vmem:[%s306 + $0x14] sm:$0xf]
  %v313 = vld [vmem:[%s306 + $0x18] sm:$0xf]
  %v314 = vld [vmem:[%s306 + $0x1c] sm:$0xf]
  %v315 = vld [vmem:[%s306 + $0x20] sm:$0xf]
  %v316 = vld [vmem:[%s306 + $0x24] sm:$0xf]
  %v317 = vld [vmem:[%s306 + $0x28] sm:$0xf]
  %v318 = vld [vmem:[%s306 + $0x2c] sm:$0xf]
  %v319 = vld [vmem:[%s306 + $0x30] sm:$0xf]
  %v320 = vld [vmem:[%s306 + $0x34] sm:$0xf]
  %v321 = vld [vmem:[%s306 + $0x38] sm:$0xf]
  %v322 = vld [vmem:[%s306 + $0x3c] sm:$0xf]
  %v323 = vld [vmem:[%s306 + $0x40] sm:$0xf]
  %v324 = vld [vmem:[%s306 + $0x44] sm:$0xf]
  %v325 = vld [vmem:[%s306 + $0x48] sm:$0x7]
  %v345 = vunpack.c.l.b16 %v307
  %v346 = vunpack.c.l.b16 %v308
  %v347 = vunpack.c.l.b16 %v309
  %v348 = vunpack.c.l.b16 %v310
  %v349 = vunpack.c.l.b16 %v311
  %v350 = vunpack.c.l.b16 %v312
  %v351 = vunpack.c.l.b16 %v313
  %v352 = vunpack.c.l.b16 %v314
  %v353 = vunpack.c.l.b16 %v315
  %v354 = vunpack.c.l.b16 %v316
  %v355 = vunpack.c.l.b16 %v317
  %v356 = vunpack.c.l.b16 %v318
  %v357 = vunpack.c.l.b16 %v319
  %v358 = vunpack.c.l.b16 %v320
  %v359 = vunpack.c.l.b16 %v321
  %v360 = vunpack.c.l.b16 %v322
  %v361 = vunpack.c.l.b16 %v323
  %v362 = vunpack.c.l.b16 %v324
  %v363 = vunpack.c.l.b16 %v325
  %v364 = vpack.c.b16 %v346, %v345
  %v365 = vpack.c.b16 %v348, %v347
  %v366 = vpack.c.b16 %v350, %v349
  %v367 = vpack.c.b16 %v352, %v351
  %v368 = vpack.c.b16 %v354, %v353
  %v369 = vpack.c.b16 %v356, %v355
  %v370 = vpack.c.b16 %v358, %v357
  %v371 = vpack.c.b16 %v360, %v359
  %v372 = vpack.c.b16 %v362, %v361
  %v373 = vpack.c.b16 %v363, %v363
  %v384 = vsel %vm120, %v373, 0
  %386 = vmatprep.subr.bf16.mxu0 0
  %387 = vmatpush1.bf16.msra.mxu0 %v364
  %388 = vmatprep.subr.bf16.mxu0 0
  %389 = vmatpush1.bf16.msra.mxu0 %v365
  %390 = vmatprep.subr.bf16.mxu0 0
  %391 = vmatpush1.bf16.msra.mxu0 %v366
  %392 = vmatprep.subr.bf16.mxu0 0
  %393 = vmatpush1.bf16.msra.mxu0 %v367
  %394 = vmatprep.subr.bf16.mxu0 0
  %395 = vmatpush1.bf16.msra.mxu0 %v368
  %396 = vmatprep.subr.bf16.mxu0 0
  %397 = vmatpush1.bf16.msra.mxu0 %v369
  %398 = vmatprep.subr.bf16.mxu0 0
  %399 = vmatpush1.bf16.msra.mxu0 %v370
  %400 = vmatprep.subr.bf16.mxu0 0
  %401 = vmatpush1.bf16.msra.mxu0 %v371
  %402 = vmatprep.subr.bf16.mxu0 0
  %403 = vmatpush1.bf16.msra.mxu0 %v372
  %404 = vmatprep.subr.bf16.mxu0 0
  %405 = vmatpush1.bf16.msra.mxu0 %v384
  %406 = vmatprep.subr.bf16.mxu0 0
  %407 = vmatpush1.bf16.msra.mxu0 0
  %408 = vmatprep.subr.bf16.mxu0 0
  %409 = vmatpush1.bf16.msra.mxu0 0
  %410 = vmatprep.subr.bf16.mxu0 0
  %411 = vmatpush1.bf16.msra.mxu0 0
  %412 = vmatprep.subr.bf16.mxu0 0
  %413 = vmatpush1.bf16.msra.mxu0 0
  %414 = vmatprep.subr.bf16.mxu0 0
  %415 = vmatpush1.bf16.msra.mxu0 0
  %416 = vmatprep.subr.bf16.mxu0 0
  %417 = vmatpush1.bf16.msra.mxu0 0
  %418 = vmatprep.mubr.bf16.mxu0 %v115
  %419 = vmatmul.mubr.bf16.gmra.mrb[0].mxu0 %v50
  %v420 = vpop.f32.mrb[0].mxu0
  %v421 = vadd.f32 0.0, %v420
  %v422 = vpop.f32.mrb[0].mxu0
  %v423 = vpop.f32.mrb[0].mxu0
  %v424 = vadd.f32 0.0, %v423
  %v425 = vpop.f32.mrb[0].mxu0
  %426 = vmatprep.mubr.bf16.mxu0 %v118
  %427 = vmatmul.mubr.bf16.gmra.mrb[0].mxu0 %v52
  %v428 = vpop.f32.mrb[0].mxu0
  %v429 = vadd.f32 0.0, %v428
  %v430 = vpop.f32.mrb[0].mxu0
  %v431 = vpop.f32.mrb[0].mxu0
  %v432 = vadd.f32 0.0, %v431
  %v433 = vpop.f32.mrb[0].mxu0
  %434 = vdwg.mxu0
  %v435 = vmax.f32 %v302, %v421
  %v436 = vmax.f32 %v303, %v424
  %v437 = vmax.f32 %v304, %v429
  %v438 = vmax.f32 %v305, %v432
  %s439 = scalar_lea.vmem %s0, 228
  %v440 = vld [vmem:[%s439] sm:$0xf]
  %v441 = vld [vmem:[%s439 + $0x4] sm:$0xf]
  %v442 = vld [vmem:[%s439 + $0x8] sm:$0xf]
  %v443 = vld [vmem:[%s439 + $0xc] sm:$0xf]
  %v444 = vld [vmem:[%s439 + $0x10] sm:$0xf]
  %v445 = vld [vmem:[%s439 + $0x14] sm:$0xf]
  %v446 = vld [vmem:[%s439 + $0x18] sm:$0xf]
  %v447 = vld [vmem:[%s439 + $0x1c] sm:$0xf]
  %v448 = vld [vmem:[%s439 + $0x20] sm:$0xf]
  %v449 = vld [vmem:[%s439 + $0x24] sm:$0xf]
  %v450 = vld [vmem:[%s439 + $0x28] sm:$0xf]
  %v451 = vld [vmem:[%s439 + $0x2c] sm:$0xf]
  %v452 = vld [vmem:[%s439 + $0x30] sm:$0xf]
  %v453 = vld [vmem:[%s439 + $0x34] sm:$0xf]
  %v454 = vld [vmem:[%s439 + $0x38] sm:$0xf]
  %v455 = vld [vmem:[%s439 + $0x3c] sm:$0xf]
  %v456 = vld [vmem:[%s439 + $0x40] sm:$0xf]
  %v457 = vld [vmem:[%s439 + $0x44] sm:$0xf]
  %v458 = vld [vmem:[%s439 + $0x48] sm:$0x7]
  %v478 = vunpack.c.l.b16 %v440
  %v479 = vunpack.c.l.b16 %v441
  %v480 = vunpack.c.l.b16 %v442
  %v481 = vunpack.c.l.b16 %v443
  %v482 = vunpack.c.l.b16 %v444
  %v483 = vunpack.c.l.b16 %v445
  %v484 = vunpack.c.l.b16 %v446
  %v485 = vunpack.c.l.b16 %v447
  %v486 = vunpack.c.l.b16 %v448
  %v487 = vunpack.c.l.b16 %v449
  %v488 = vunpack.c.l.b16 %v450
  %v489 = vunpack.c.l.b16 %v451
  %v490 = vunpack.c.l.b16 %v452
  %v491 = vunpack.c.l.b16 %v453
  %v492 = vunpack.c.l.b16 %v454
  %v493 = vunpack.c.l.b16 %v455
  %v494 = vunpack.c.l.b16 %v456
  %v495 = vunpack.c.l.b16 %v457
  %v496 = vunpack.c.l.b16 %v458
  %v497 = vpack.c.b16 %v479, %v478
  %v498 = vpack.c.b16 %v481, %v480
  %v499 = vpack.c.b16 %v483, %v482
  %v500 = vpack.c.b16 %v485, %v484
  %v501 = vpack.c.b16 %v487, %v486
  %v502 = vpack.c.b16 %v489, %v488
  %v503 = vpack.c.b16 %v491, %v490
  %v504 = vpack.c.b16 %v493, %v492
  %v505 = vpack.c.b16 %v495, %v494
  %v506 = vpack.c.b16 %v496, %v496
  %v517 = vsel %vm120, %v506, 0
  %519 = vmatprep.subr.bf16.mxu0 0
  %520 = vmatpush1.bf16.msra.mxu0 %v497
  %521 = vmatprep.subr.bf16.mxu0 0
  %522 = vmatpush1.bf16.msra.mxu0 %v498
  %523 = vmatprep.subr.bf16.mxu0 0
  %524 = vmatpush1.bf16.msra.mxu0 %v499
  %525 = vmatprep.subr.bf16.mxu0 0
  %526 = vmatpush1.bf16.msra.mxu0 %v500
  %527 = vmatprep.subr.bf16.mxu0 0
  %528 = vmatpush1.bf16.msra.mxu0 %v501
  %529 = vmatprep.subr.bf16.mxu0 0
  %530 = vmatpush1.bf16.msra.mxu0 %v502
  %531 = vmatprep.subr.bf16.mxu0 0
  %532 = vmatpush1.bf16.msra.mxu0 %v503
  %533 = vmatprep.subr.bf16.mxu0 0
  %534 = vmatpush1.bf16.msra.mxu0 %v504
  %535 = vmatprep.subr.bf16.mxu0 0
  %536 = vmatpush1.bf16.msra.mxu0 %v505
  %537 = vmatprep.subr.bf16.mxu0 0
  %538 = vmatpush1.bf16.msra.mxu0 %v517
  %539 = vmatprep.subr.bf16.mxu0 0
  %540 = vmatpush1.bf16.msra.mxu0 0
  %541 = vmatprep.subr.bf16.mxu0 0
  %542 = vmatpush1.bf16.msra.mxu0 0
  %543 = vmatprep.subr.bf16.mxu0 0
  %544 = vmatpush1.bf16.msra.mxu0 0
  %545 = vmatprep.subr.bf16.mxu0 0
  %546 = vmatpush1.bf16.msra.mxu0 0
  %547 = vmatprep.subr.bf16.mxu0 0
  %548 = vmatpush1.bf16.msra.mxu0 0
  %549 = vmatprep.subr.bf16.mxu0 0
  %550 = vmatpush1.bf16.msra.mxu0 0
  %551 = vmatprep.mubr.bf16.mxu0 %v115
  %552 = vmatmul.mubr.bf16.gmra.mrb[0].mxu0 %v50
  %v553 = vpop.f32.mrb[0].mxu0
  %v554 = vadd.f32 0.0, %v553
  %v555 = vpop.f32.mrb[0].mxu0
  %v556 = vpop.f32.mrb[0].mxu0
  %v557 = vadd.f32 0.0, %v556
  %v558 = vpop.f32.mrb[0].mxu0
  %559 = vmatprep.mubr.bf16.mxu0 %v118
  %560 = vmatmul.mubr.bf16.gmra.mrb[0].mxu0 %v52
  %v561 = vpop.f32.mrb[0].mxu0
  %v562 = vadd.f32 0.0, %v561
  %v563 = vpop.f32.mrb[0].mxu0
  %v564 = vpop.f32.mrb[0].mxu0
  %v565 = vadd.f32 0.0, %v564
  %v566 = vpop.f32.mrb[0].mxu0
  %567 = vdwg.mxu0
  %v568 = vmax.f32 %v435, %v554
  %v569 = vmax.f32 %v436, %v557
  %v570 = vmax.f32 %v437, %v562
  %v571 = vmax.f32 %v438, %v565
  %v572 = vld [vmem:[%s2] sm:$0xff]
  %v573 = vld [vmem:[%s2 + $0x8] sm:$0xff]
  %v574 = vld [vmem:[%s2 + $0x10] sm:$0xff]
  %v575 = vld [vmem:[%s2 + $0x18] sm:$0xff]
  %577 = vset.pattern.permute.xlu0 0
  %578 = vperm.xlu0 %577, %v572
  %v579 = vpop.permute.xlu0 %578
  %582 = vset.pattern.permute.xlu0 0
  %583 = vperm.xlu0 %582, %v573
  %v584 = vpop.permute.xlu0 %583
  %587 = vset.pattern.permute.xlu0 0
  %588 = vperm.xlu0 %587, %v574
  %v589 = vpop.permute.xlu0 %588
  %592 = vset.pattern.permute.xlu0 0
  %593 = vperm.xlu0 %592, %v575
  %v594 = vpop.permute.xlu0 %593
  %v596 = vadd.f32 %v568, %v579
  %v597 = vadd.f32 %v569, %v584
  %v598 = vadd.f32 %v570, %v589
  %v599 = vadd.f32 %v571, %v594
  %v600 = vmax.f32 %v596, 0.0
  %v601 = vmax.f32 %v597, 0.0
  %v602 = vmax.f32 %v598, 0.0
  %v603 = vmax.f32 %v599, 0.0
  %v604 = vadd.f32 %v600, %v602
  %v605 = vadd.f32 %v601, %v603
  %vm606 = vcmask 408576
  %607 = vst.msk [vmem:[%s3] sm:$0xff] %vm606, %v604
  %608 = vst.msk [vmem:[%s3 + $0x8] sm:$0xff] %vm606, %v605
  // Predicated region
  $region14: #{lenet_frame_frontend.3} parent=0 // pred_check
    _
  $region15: #{lenet_frame_frontend.3} parent=0 // pred_check_branch
    %610 = sbr.rel (0) target = $region17
  $region16: #{lenet_frame_frontend.3} parent=0 // pred_region
    _
  $region17: #{lenet_frame_frontend.3} parent=0 // pred_fallthru
    _
  // Predicated region
  $region18: #{lenet_frame_frontend.3} parent=0 // pred_check
    _
  $region19: #{lenet_frame_frontend.3} parent=0 // pred_check_branch
    %612 = sbr.rel (0) target = $region21
  $region20: #{lenet_frame_frontend.3} parent=0 // pred_region
    _
  $region21: #{lenet_frame_frontend.3} parent=0 // pred_fallthru
    _

</llo_original>
